<compile_context>
chip_gen: v7x
topology: tpu7x:2x2x1
jax: 0.10.0
libtpu: 0.0.40
codegen_flags: <defaults>
</compile_context>

<pallas_src>
import functools

import jax
import jax.numpy as jnp
import numpy as np
from jax.experimental import pallas as pl
from jax.experimental.pallas import tpu as pltpu


# --------------------------------------------------------------------------
# Kernel
# --------------------------------------------------------------------------
def gprgnn_kernel(temp_ref, xT_ref, w1T_ref, b1_ref, w2T_ref, b2_ref, adj_ref,
                  out_ref, z_ref, hid_ref, *,
                  K, C, tn, num_tiles, adj_resident):
    """grid = (K+1 phases, node tiles).  Phase 0: MLP.  Phases 1..K: GPR hops."""
    p = pl.program_id(0)            # phase: 0 = MLP, 1..K = propagation hop k
    j = pl.program_id(1)            # node (column) tile in the [C, N] layout
    C_pad = out_ref.shape[0]
    gamma = temp_ref[p]             # temp[0] for the MLP phase, temp[k] for hop k

    # Phase-parity ping-pong into a single flat z scratch (2*num_tiles, C_pad, tn):
    # phase p writes half (p % 2), phase p reads half ((p+1) % 2).
    wr = jax.lax.rem(p, 2) * num_tiles
    rd = jax.lax.rem(p + 1, 2) * num_tiles

    # ---- phase 0: fused MLP  z0 = W2^T . relu(W1^T . x^T + b1) + b2 ---------
    @pl.when(p == 0)
    def _mlp():
        h = jnp.dot(w1T_ref[...], xT_ref[...],
                    preferred_element_type=jnp.float32) + b1_ref[...]
        h = jnp.maximum(h, 0.0)
        z0 = jnp.dot(w2T_ref[...], h.astype(jnp.bfloat16),
                     preferred_element_type=jnp.float32) + b2_ref[...]
        z_ref[wr + j] = z0.astype(jnp.bfloat16)
        hid_ref[j] = gamma * z0                        # hidden = temp[0] * z0

    # ---- phases 1..K: one propagation hop for node tile j -------------------
    @pl.when(p > 0)
    def _prop():
        aj = j if adj_resident else 0                  # resident: pick stripe j
        acc = jnp.zeros((C_pad, tn), jnp.float32)

        if num_tiles <= 8:                             # small graphs: static unroll
            for t in range(num_tiles):
                a_blk = adj_ref[aj, pl.ds(t * tn, tn), :]          # (tn, tn) bf16
                acc = acc + jnp.dot(z_ref[rd + t], a_blk,
                                    preferred_element_type=jnp.float32)
        else:                                          # large graphs: unrolled fori
            def body(t, a):
                a_blk = adj_ref[aj, pl.ds(pl.multiple_of(t * tn, tn), tn), :]
                return a + jnp.dot(z_ref[rd + t], a_blk,
                                   preferred_element_type=jnp.float32)
            acc = jax.lax.fori_loop(0, num_tiles, body, acc, unroll=4)

        z_ref[wr + j] = acc.astype(jnp.bfloat16)       # z_k (tile j) for next hop
        hid = hid_ref[j] + gamma * acc
        hid_ref[j] = hid

        # ---- last hop: log_softmax over the class (sublane) axis -----------
        @pl.when(p == K)
        def _log_softmax():
            if C_pad != C:                             # mask padded class rows
                row = jax.lax.broadcasted_iota(jnp.int32, (C_pad, tn), 0)
                hm = jnp.where(row < C, hid, -1e30)
            else:
                hm = hid
            m = jnp.max(hm, axis=0, keepdims=True)
            sh = hm - m
            lse = jnp.log(jnp.sum(jnp.exp(sh), axis=0, keepdims=True))
            out_ref[...] = sh - lse


# --------------------------------------------------------------------------
# Glue / wrapper
# --------------------------------------------------------------------------
def _round_up(x, m):
    return (x + m - 1) // m * m


def _vmem_capacity_bytes():
    # Generation-aware ceiling: 128 MiB on v5e/v6e, 64 MiB per core on v7x.
    try:
        return int(pltpu.get_tpu_info().vmem_capacity_bytes)
    except Exception:
        return 64 << 20            # v7x floor -> safe on every generation


def build_gcn_norm_adj(edge_index, num_nodes, dtype=jnp.float32):
    """Dense symmetric GCN normalization with self-loops (plain-JAX glue)."""
    src, dst = edge_index[0], edge_index[1]
    a = jnp.zeros((num_nodes, num_nodes), dtype).at[dst, src].add(1.0)
    a = a + jnp.eye(num_nodes, dtype=dtype)            # add self-loops
    deg = jnp.sum(a, axis=1)
    dinv = jax.lax.rsqrt(deg)                          # deg > 0 (self-loops)
    return a * dinv[:, None] * dinv[None, :]


def gprgnn_forward(x, edge_index, params, K, *, tn=256, adj_resident_bytes=None):
    N, F_in = x.shape
    H = params["w1"].shape[1]
    C = params["w2"].shape[1]
    assert K >= 1, "GPR propagation needs K >= 1"

    C_pad = _round_up(C, 16)        # 16: native bf16 sublane packing for z scratch
    N_pad = _round_up(N, tn)
    num_tiles = N_pad // tn

    # ---- adjacency: GCN-normalized, transposed, zero-padded, bf16 ----------
    a_hat = build_gcn_norm_adj(edge_index, N, jnp.float32)
    adjT = jnp.zeros((N_pad, N_pad), jnp.float32).at[:N, :N].set(a_hat.T)
    adjT = adjT.astype(jnp.bfloat16)
    # Column-blocked layout (num_tiles, N_pad, tn): stripe j holds the columns
    # of A_hat^T producing output tile j (avoids dynamic lane-dim slicing).
    adjT_blk = adjT.reshape(N_pad, num_tiles, tn).transpose(1, 0, 2)

    # ---- transposed / padded / bf16 MXU operands ---------------------------
    xT = jnp.zeros((F_in, N_pad), jnp.float32).at[:, :N].set(x.T).astype(jnp.bfloat16)
    w1T = params["w1"].T.astype(jnp.bfloat16)                                 # [H, F_in]
    w2T = (jnp.zeros((C_pad, H), jnp.float32)
           .at[:C].set(params["w2"].T).astype(jnp.bfloat16))                  # [C_pad, H]
    b1 = params["b1"].astype(jnp.float32).reshape(H, 1)
    b2 = jnp.zeros((C_pad, 1), jnp.float32).at[:C, 0].set(params["b2"])
    temp = params["temp"].astype(jnp.float32)

    # ---- VMEM footprint bookkeeping (bytes) ---------------------------------
    z_bytes = 2 * num_tiles * C_pad * tn * 2           # bf16 ping-pong z scratch
    hid_bytes = num_tiles * C_pad * tn * 4             # f32 hidden accumulator
    w_bytes = 2 * (H * F_in * 2 + C_pad * H * 2 + (H + C_pad) * 4)
    x_bytes = 2 * F_in * tn * 2
    o_bytes = 2 * C_pad * tn * 4
    fixed = z_bytes + hid_bytes + w_bytes + x_bytes + o_bytes

    cap = _vmem_capacity_bytes()
    headroom = max(8 << 20, cap // 8)                  # 8 MiB (v7x) / 16 MiB (v5e/v6e)

    # ---- adjacency residency: one DMA + K reuses when it fits --------------
    adj_bytes = num_tiles * N_pad * tn * 2             # bf16
    adj_budget = cap - headroom - fixed                # capacity-derived budget
    if adj_resident_bytes is not None:
        adj_budget = min(adj_budget, adj_resident_bytes)
    # 2x: constant-index inputs are still double-buffered by default.
    adj_resident = 2 * adj_bytes <= adj_budget

    if adj_resident:
        adj_spec = pl.BlockSpec((num_tiles, N_pad, tn), lambda p, j: (0, 0, 0))
        adj_vmem = 2 * adj_bytes
    else:
        # Phase-gated index: phase 0 (MLP) never reads A, keep the index
        # constant there so it is not streamed; phases 1..K stream stripe j.
        adj_spec = pl.BlockSpec((1, N_pad, tn),
                                lambda p, j: (jnp.where(p == 0, 0, j), 0, 0))
        adj_vmem = 2 * N_pad * tn * 2

    total = fixed + adj_vmem
    vmem_limit = int(min(max(int(1.25 * total) + (4 << 20), 32 << 20),
                         cap - headroom))

    kernel = functools.partial(gprgnn_kernel, K=K, C=C, tn=tn,
                               num_tiles=num_tiles, adj_resident=adj_resident)

    out_pad = pl.pallas_call(
        kernel,
        out_shape=jax.ShapeDtypeStruct((C_pad, N_pad), jnp.float32),
        grid=(K + 1, num_tiles),                       # (phase, node tile)
        in_specs=[
            pl.BlockSpec(memory_space=pltpu.MemorySpace.SMEM),   # temp (K+1,)
            # x^T tile: only indexed during phase 0 (no refetch during hops)
            pl.BlockSpec((F_in, tn), lambda p, j: (0, jnp.where(p == 0, j, 0))),
            pl.BlockSpec((H, F_in), lambda p, j: (0, 0)),        # W1^T
            pl.BlockSpec((H, 1), lambda p, j: (0, 0)),           # b1
            pl.BlockSpec((C_pad, H), lambda p, j: (0, 0)),       # W2^T
            pl.BlockSpec((C_pad, 1), lambda p, j: (0, 0)),       # b2
            adj_spec,                                            # A_hat^T (blocked)
        ],
        # Output block index only advances during the final phase: exactly one
        # writeback per output tile, never a stale/uninitialized one.
        out_specs=pl.BlockSpec((C_pad, tn),
                               lambda p, j: (0, jnp.where(p == K, j, 0))),
        scratch_shapes=[
            pltpu.VMEM((2 * num_tiles, C_pad, tn), jnp.bfloat16),  # z ping-pong
            pltpu.VMEM((num_tiles, C_pad, tn), jnp.float32),       # hidden accum
        ],
        compiler_params=pltpu.CompilerParams(
            # Both axes are sequential: phase k+1 consumes every tile of z_k,
            # and all tiles share the z/hidden VMEM scratch, so neither axis
            # can be megacore-sharded.  "arbitrary" is correct on v5e/v6e/v7x.
            dimension_semantics=("arbitrary", "arbitrary"),
            vmem_limit_bytes=vmem_limit,
        ),
    )(temp, xT, w1T, b1, w2T, b2, adjT_blk)

    return out_pad[:C, :N].T        # back to [N, C]; drop class/node padding


# --------------------------------------------------------------------------
# Pure-JAX reference (mirrors the kernel's bf16-input / f32-accum policy)
# --------------------------------------------------------------------------
def reference_forward(x, edge_index, params, K):
    f32 = jnp.float32
    a_hat = build_gcn_norm_adj(edge_index, x.shape[0], f32)
    adj = a_hat.astype(jnp.bfloat16).astype(f32)
    xb = x.astype(jnp.bfloat16).astype(f32)
    w1 = params["w1"].astype(jnp.bfloat16).astype(f32)
    w2 = params["w2"].astype(jnp.bfloat16).astype(f32)
    h = jnp.maximum(xb @ w1 + params["b1"], 0.0)
    z = h.astype(jnp.bfloat16).astype(f32) @ w2 + params["b2"]
    hidden = params["temp"][0] * z
    for k in range(K):
        z = adj @ z.astype(jnp.bfloat16).astype(f32)
        hidden = hidden + params["temp"][k + 1] * z
    return jax.nn.log_softmax(hidden, axis=1)


# --------------------------------------------------------------------------
if __name__ == "__main__":
    # Small deterministic config (eval mode: dropout layers are identity).
    N, F_in, H, C = 300, 32, 32, 8          # nodes, in/hidden/out channels
    K, alpha = 4, 0.1                        # GPR_Prop(K, alpha, Init='PPR')

    key = jax.random.PRNGKey(0)
    kx, k1, k2, k3, k4 = jax.random.split(key, 5)

    x = jax.random.normal(kx, (N, F_in), jnp.float32)

    # Deterministic undirected ring graph: edge_index [2, 2N]
    idx = np.arange(N)
    src = np.concatenate([idx, (idx + 1) % N])
    dst = np.concatenate([(idx + 1) % N, idx])
    edge_index = jnp.asarray(np.stack([src, dst]), jnp.int32)

    # Deterministic parameter init (nn.Linear weights stored transposed [in, out])
    bound1 = 1.0 / np.sqrt(F_in)
    bound2 = 1.0 / np.sqrt(H)
    params = {
        "w1": jax.random.uniform(k1, (F_in, H), jnp.float32, -bound1, bound1),
        "b1": jax.random.uniform(k2, (H,), jnp.float32, -bound1, bound1),
        "w2": jax.random.uniform(k3, (H, C), jnp.float32, -bound2, bound2),
        "b2": jax.random.uniform(k4, (C,), jnp.float32, -bound2, bound2),
        # GPR_Prop 'PPR' init: temp[k] = alpha*(1-alpha)^k, temp[K] = (1-alpha)^K
        "temp": jnp.asarray(
            np.concatenate([alpha * (1 - alpha) ** np.arange(K),
                            [(1 - alpha) ** K]]).astype(np.float32)),
    }

    ref = reference_forward(x, edge_index, params, K)

    # 1) Default path: adjacency kept VMEM-resident (one DMA, K reuses).
    out_res = jax.block_until_ready(gprgnn_forward(x, edge_index, params, K))
    assert out_res.shape == (N, C)
    np.testing.assert_allclose(np.asarray(out_res), np.asarray(ref),
                               rtol=2e-3, atol=2e-3)

    # 2) Streamed path: force the double-buffered column-stripe pipeline that
    #    large graphs / v7x's 64 MiB VMEM would use.
    out_str = jax.block_until_ready(
        gprgnn_forward(x, edge_index, params, K, adj_resident_bytes=0))
    np.testing.assert_allclose(np.asarray(out_str), np.asarray(ref),
                               rtol=2e-3, atol=2e-3)

    print("KERNEL_OK")
</pallas_src>

<mosaic_0001>
module attributes {stable_mosaic.version = 11 : i64} {
  func.func @gprgnn_kernel(%arg0: i32, %arg1: i32, %arg2: memref<5xf32, #tpu.memory_space<smem>>, %arg3: memref<32x256xbf16, #tpu.memory_space<vmem>>, %arg4: memref<32x32xbf16, #tpu.memory_space<vmem>>, %arg5: memref<32x1xf32, #tpu.memory_space<vmem>>, %arg6: memref<16x32xbf16, #tpu.memory_space<vmem>>, %arg7: memref<16x1xf32, #tpu.memory_space<vmem>>, %arg8: memref<2x512x256xbf16, #tpu.memory_space<vmem>>, %arg9: memref<16x256xf32, #tpu.memory_space<vmem>>, %arg10: memref<4x16x256xbf16, #tpu.memory_space<vmem>>, %arg11: memref<2x16x256xf32, #tpu.memory_space<vmem>>) attributes {dimension_semantics = [#tpu.dimension_semantics<arbitrary>, #tpu.dimension_semantics<arbitrary>], iteration_bounds = array<i64: 5, 2>, scalar_prefetch = 0 : i64, scratch_operands = 2 : i64, tpu.core_type = #tpu.core_type<tc>, window_params = [{transform_indices = @transform_0, window_bounds = array<i64: 5>}, {transform_indices = @transform_1, window_bounds = array<i64: 32, 256>}, {pipeline_mode = #tpu.pipeline_mode<synchronous>, transform_indices = @transform_2, window_bounds = array<i64: 32, 32>}, {pipeline_mode = #tpu.pipeline_mode<synchronous>, transform_indices = @transform_3, window_bounds = array<i64: 32, 1>}, {pipeline_mode = #tpu.pipeline_mode<synchronous>, transform_indices = @transform_4, window_bounds = array<i64: 16, 32>}, {pipeline_mode = #tpu.pipeline_mode<synchronous>, transform_indices = @transform_5, window_bounds = array<i64: 16, 1>}, {pipeline_mode = #tpu.pipeline_mode<synchronous>, transform_indices = @transform_6, window_bounds = array<i64: 2, 512, 256>}, {transform_indices = @transform_7, window_bounds = array<i64: 16, 256>}]} {
    %0 = arith.index_cast %arg0 : i32 to index
    %1 = memref.load %arg2[%0] : memref<5xf32, #tpu.memory_space<smem>>
    %c2_i32 = arith.constant 2 : i32
    %2 = arith.remsi %arg0, %c2_i32 : i32
    %c2_i32_0 = arith.constant 2 : i32
    %3 = arith.muli %2, %c2_i32_0 : i32
    %c1_i32 = arith.constant 1 : i32
    %4 = arith.addi %arg0, %c1_i32 : i32
    %c2_i32_1 = arith.constant 2 : i32
    %5 = arith.remsi %4, %c2_i32_1 : i32
    %c2_i32_2 = arith.constant 2 : i32
    %6 = arith.muli %5, %c2_i32_2 : i32
    %c0_i32 = arith.constant 0 : i32
    %7 = arith.cmpi eq, %arg0, %c0_i32 : i32
    %8 = arith.extui %7 : i1 to i32
    %c0_i32_3 = arith.constant 0 : i32
    %9 = arith.cmpi ne, %8, %c0_i32_3 : i32
    scf.if %9 {
      %c0 = arith.constant 0 : index
      %c0_6 = arith.constant 0 : index
      %13 = vector.load %arg4[%c0, %c0_6] : memref<32x32xbf16, #tpu.memory_space<vmem>>, vector<32x32xbf16>
      %c0_7 = arith.constant 0 : index
      %c0_8 = arith.constant 0 : index
      %14 = vector.load %arg3[%c0_7, %c0_8] : memref<32x256xbf16, #tpu.memory_space<vmem>>, vector<32x256xbf16>
      %cst = arith.constant dense<0.000000e+00> : vector<32x256xf32>
      %15 = tpu.matmul %13, %14, %cst {dimension_numbers = #tpu.dot_dimension_numbers<[1], [0], [0], [1], [0, 0, 1, 1], [], []>} : vector<32x32xbf16>, vector<32x256xbf16>, vector<32x256xf32> -> vector<32x256xf32>
      %c0_9 = arith.constant 0 : index
      %c0_10 = arith.constant 0 : index
      %16 = vector.load %arg5[%c0_9, %c0_10] : memref<32x1xf32, #tpu.memory_space<vmem>>, vector<32x1xf32>
      %17 = vector.broadcast %16 : vector<32x1xf32> to vector<32x256xf32>
      %18 = arith.addf %15, %17 : vector<32x256xf32>
      %cst_11 = arith.constant 0.000000e+00 : f32
      %19 = vector.broadcast %cst_11 : f32 to vector<32x256xf32>
      %20 = arith.maximumf %18, %19 : vector<32x256xf32>
      %c0_12 = arith.constant 0 : index
      %c0_13 = arith.constant 0 : index
      %21 = vector.load %arg6[%c0_12, %c0_13] : memref<16x32xbf16, #tpu.memory_space<vmem>>, vector<16x32xbf16>
      %22 = arith.truncf %20 : vector<32x256xf32> to vector<32x256xbf16>
      %cst_14 = arith.constant dense<0.000000e+00> : vector<16x256xf32>
      %23 = tpu.matmul %21, %22, %cst_14 {dimension_numbers = #tpu.dot_dimension_numbers<[1], [0], [0], [1], [0, 0, 1, 1], [], []>} : vector<16x32xbf16>, vector<32x256xbf16>, vector<16x256xf32> -> vector<16x256xf32>
      %c0_15 = arith.constant 0 : index
      %c0_16 = arith.constant 0 : index
      %24 = vector.load %arg7[%c0_15, %c0_16] : memref<16x1xf32, #tpu.memory_space<vmem>>, vector<16x1xf32>
      %25 = vector.broadcast %24 : vector<16x1xf32> to vector<16x256xf32>
      %26 = arith.addf %23, %25 : vector<16x256xf32>
      %27 = arith.truncf %26 : vector<16x256xf32> to vector<16x256xbf16>
      %28 = arith.addi %3, %arg1 : i32
      %29 = arith.index_cast %28 : i32 to index
      %c0_17 = arith.constant 0 : index
      %c0_18 = arith.constant 0 : index
      %30 = vector.load %arg10[%29, %c0_17, %c0_18] : memref<4x16x256xbf16, #tpu.memory_space<vmem>>, vector<1x16x256xbf16>
      %31 = vector.shape_cast %30 : vector<1x16x256xbf16> to vector<16x256xbf16>
      %32 = vector.shape_cast %27 : vector<16x256xbf16> to vector<1x16x256xbf16>
      tpu.vector_store %arg10[%29, %c0_17, %c0_18], %32 {strides = array<i32>} : memref<4x16x256xbf16, #tpu.memory_space<vmem>>, vector<1x16x256xbf16>,
      %33 = vector.broadcast %1 : f32 to vector<16x256xf32>
      %34 = arith.mulf %33, %26 : vector<16x256xf32>
      %35 = arith.index_cast %arg1 : i32 to index
      %c0_19 = arith.constant 0 : index
      %c0_20 = arith.constant 0 : index
      %36 = vector.load %arg11[%35, %c0_19, %c0_20] : memref<2x16x256xf32, #tpu.memory_space<vmem>>, vector<1x16x256xf32>
      %37 = vector.shape_cast %36 : vector<1x16x256xf32> to vector<16x256xf32>
      %38 = vector.shape_cast %34 : vector<16x256xf32> to vector<1x16x256xf32>
      tpu.vector_store %arg11[%35, %c0_19, %c0_20], %38 {strides = array<i32>} : memref<2x16x256xf32, #tpu.memory_space<vmem>>, vector<1x16x256xf32>,
    } else {
    }
    %c0_i32_4 = arith.constant 0 : i32
    %10 = arith.cmpi sgt, %arg0, %c0_i32_4 : i32
    %11 = arith.extui %10 : i1 to i32
    %c0_i32_5 = arith.constant 0 : i32
    %12 = arith.cmpi ne, %11, %c0_i32_5 : i32
    scf.if %12 {
      %cst = arith.constant 0.000000e+00 : f32
      %13 = vector.broadcast %cst : f32 to vector<16x256xf32>
      %14 = arith.index_cast %arg1 : i32 to index
      %c0 = arith.constant 0 : index
      %c0_6 = arith.constant 0 : index
      %15 = vector.load %arg8[%14, %c0, %c0_6] : memref<2x512x256xbf16, #tpu.memory_space<vmem>>, vector<1x256x256xbf16>
      %16 = vector.shape_cast %15 : vector<1x256x256xbf16> to vector<256x256xbf16>
      %c0_i32_7 = arith.constant 0 : i32
      %17 = arith.addi %6, %c0_i32_7 : i32
      %18 = arith.index_cast %17 : i32 to index
      %c0_8 = arith.constant 0 : index
      %c0_9 = arith.constant 0 : index
      %19 = vector.load %arg10[%18, %c0_8, %c0_9] : memref<4x16x256xbf16, #tpu.memory_space<vmem>>, vector<1x16x256xbf16>
      %20 = vector.shape_cast %19 : vector<1x16x256xbf16> to vector<16x256xbf16>
      %cst_10 = arith.constant dense<0.000000e+00> : vector<16x256xf32>
      %21 = tpu.matmul %20, %16, %cst_10 {dimension_numbers = #tpu.dot_dimension_numbers<[1], [0], [0], [1], [0, 0, 1, 1], [], []>} : vector<16x256xbf16>, vector<256x256xbf16>, vector<16x256xf32> -> vector<16x256xf32>
      %22 = arith.addf %13, %21 : vector<16x256xf32>
      %23 = arith.index_cast %arg1 : i32 to index
      %c256 = arith.constant 256 : index
      %c0_11 = arith.constant 0 : index
      %24 = vector.load %arg8[%23, %c256, %c0_11] : memref<2x512x256xbf16, #tpu.memory_space<vmem>>, vector<1x256x256xbf16>
      %25 = vector.shape_cast %24 : vector<1x256x256xbf16> to vector<256x256xbf16>
      %c1_i32_12 = arith.constant 1 : i32
      %26 = arith.addi %6, %c1_i32_12 : i32
      %27 = arith.index_cast %26 : i32 to index
      %c0_13 = arith.constant 0 : index
      %c0_14 = arith.constant 0 : index
      %28 = vector.load %arg10[%27, %c0_13, %c0_14] : memref<4x16x256xbf16, #tpu.memory_space<vmem>>, vector<1x16x256xbf16>
      %29 = vector.shape_cast %28 : vector<1x16x256xbf16> to vector<16x256xbf16>
      %cst_15 = arith.constant dense<0.000000e+00> : vector<16x256xf32>
      %30 = tpu.matmul %29, %25, %cst_15 {dimension_numbers = #tpu.dot_dimension_numbers<[1], [0], [0], [1], [0, 0, 1, 1], [], []>} : vector<16x256xbf16>, vector<256x256xbf16>, vector<16x256xf32> -> vector<16x256xf32>
      %31 = arith.addf %22, %30 : vector<16x256xf32>
      %32 = arith.truncf %31 : vector<16x256xf32> to vector<16x256xbf16>
      %33 = arith.addi %3, %arg1 : i32
      %34 = arith.index_cast %33 : i32 to index
      %c0_16 = arith.constant 0 : index
      %c0_17 = arith.constant 0 : index
      %35 = vector.load %arg10[%34, %c0_16, %c0_17] : memref<4x16x256xbf16, #tpu.memory_space<vmem>>, vector<1x16x256xbf16>
      %36 = vector.shape_cast %35 : vector<1x16x256xbf16> to vector<16x256xbf16>
      %37 = vector.shape_cast %32 : vector<16x256xbf16> to vector<1x16x256xbf16>
      tpu.vector_store %arg10[%34, %c0_16, %c0_17], %37 {strides = array<i32>} : memref<4x16x256xbf16, #tpu.memory_space<vmem>>, vector<1x16x256xbf16>,
      %38 = arith.index_cast %arg1 : i32 to index
      %c0_18 = arith.constant 0 : index
      %c0_19 = arith.constant 0 : index
      %39 = vector.load %arg11[%38, %c0_18, %c0_19] : memref<2x16x256xf32, #tpu.memory_space<vmem>>, vector<1x16x256xf32>
      %40 = vector.shape_cast %39 : vector<1x16x256xf32> to vector<16x256xf32>
      %41 = vector.broadcast %1 : f32 to vector<16x256xf32>
      %42 = arith.mulf %41, %31 : vector<16x256xf32>
      %43 = arith.addf %40, %42 : vector<16x256xf32>
      %44 = arith.index_cast %arg1 : i32 to index
      %c0_20 = arith.constant 0 : index
      %c0_21 = arith.constant 0 : index
      %45 = vector.load %arg11[%44, %c0_20, %c0_21] : memref<2x16x256xf32, #tpu.memory_space<vmem>>, vector<1x16x256xf32>
      %46 = vector.shape_cast %45 : vector<1x16x256xf32> to vector<16x256xf32>
      %47 = vector.shape_cast %43 : vector<16x256xf32> to vector<1x16x256xf32>
      tpu.vector_store %arg11[%44, %c0_20, %c0_21], %47 {strides = array<i32>} : memref<2x16x256xf32, #tpu.memory_space<vmem>>, vector<1x16x256xf32>,
      %c4_i32 = arith.constant 4 : i32
      %48 = arith.cmpi eq, %arg0, %c4_i32 : i32
      %49 = arith.extui %48 : i1 to i32
      %c0_i32_22 = arith.constant 0 : i32
      %50 = arith.cmpi ne, %49, %c0_i32_22 : i32
      scf.if %50 {
        %51 = tpu.iota {dimensions = array<i32: 0>} : vector<16x256xi32>
        %c8_i32 = arith.constant 8 : i32
        %52 = vector.broadcast %c8_i32 : i32 to vector<16x256xi32>
        %53 = arith.cmpi slt, %51, %52 : vector<16x256xi32>
        %cst_23 = arith.constant -1.000000e+30 : f32
        %54 = vector.broadcast %cst_23 : f32 to vector<16x256xf32>
        %55 = arith.select %53, %43, %54 : vector<16x256xi1>, vector<16x256xf32>
        %cst_24 = arith.constant dense<0xFF800000> : vector<256xf32>
        %56 = vector.multi_reduction <maximumf>, %55, %cst_24 [0] : vector<16x256xf32> to vector<256xf32>
        %57 = vector.shape_cast %56 : vector<256xf32> to vector<1x256xf32>
        %58 = vector.broadcast %57 : vector<1x256xf32> to vector<16x256xf32>
        %59 = arith.subf %55, %58 : vector<16x256xf32>
        %60 = math.exp %59 : vector<16x256xf32>
        %cst_25 = arith.constant dense<0.000000e+00> : vector<256xf32>
        %61 = vector.multi_reduction <add>, %60, %cst_25 [0] : vector<16x256xf32> to vector<256xf32>
        %62 = vector.shape_cast %61 : vector<256xf32> to vector<1x256xf32>
        %63 = math.log %62 : vector<1x256xf32>
        %64 = vector.broadcast %63 : vector<1x256xf32> to vector<16x256xf32>
        %65 = arith.subf %59, %64 : vector<16x256xf32>
        %c0_26 = arith.constant 0 : index
        %c0_27 = arith.constant 0 : index
        %66 = vector.load %arg9[%c0_26, %c0_27] : memref<16x256xf32, #tpu.memory_space<vmem>>, vector<16x256xf32>
        tpu.vector_store %arg9[%c0_26, %c0_27], %65 {strides = array<i32>} : memref<16x256xf32, #tpu.memory_space<vmem>>, vector<16x256xf32>,
      } else {
      }
    } else {
    }
    return
  }
  func.func @transform_0(%arg0: i32, %arg1: i32) -> i32 {
    %c0_i32 = arith.constant 0 : i32
    %c0_i32_0 = arith.constant 0 : i32
    return %c0_i32 : i32
  }
  func.func @transform_1(%arg0: i32, %arg1: i32) -> (i32, i32) {
    %c0_i32 = arith.constant 0 : i32
    %0 = arith.cmpi eq, %arg0, %c0_i32 : i32
    %c0_i32_0 = arith.constant 0 : i32
    %1 = arith.select %0, %arg1, %c0_i32_0 : i32
    %c0_i32_1 = arith.constant 0 : i32
    %c0_i32_2 = arith.constant 0 : i32
    return %c0_i32_1, %1 : i32, i32
  }
  func.func @transform_2(%arg0: i32, %arg1: i32) -> (i32, i32) {
    %c0_i32 = arith.constant 0 : i32
    %c0_i32_0 = arith.constant 0 : i32
    %c0_i32_1 = arith.constant 0 : i32
    return %c0_i32, %c0_i32_0 : i32, i32
  }
  func.func @transform_3(%arg0: i32, %arg1: i32) -> (i32, i32) {
    %c0_i32 = arith.constant 0 : i32
    %c0_i32_0 = arith.constant 0 : i32
    %c0_i32_1 = arith.constant 0 : i32
    return %c0_i32, %c0_i32_0 : i32, i32
  }
  func.func @transform_4(%arg0: i32, %arg1: i32) -> (i32, i32) {
    %c0_i32 = arith.constant 0 : i32
    %c0_i32_0 = arith.constant 0 : i32
    %c0_i32_1 = arith.constant 0 : i32
    return %c0_i32, %c0_i32_0 : i32, i32
  }
  func.func @transform_5(%arg0: i32, %arg1: i32) -> (i32, i32) {
    %c0_i32 = arith.constant 0 : i32
    %c0_i32_0 = arith.constant 0 : i32
    %c0_i32_1 = arith.constant 0 : i32
    return %c0_i32, %c0_i32_0 : i32, i32
  }
  func.func @transform_6(%arg0: i32, %arg1: i32) -> (i32, i32, i32) {
    %c0_i32 = arith.constant 0 : i32
    %c0_i32_0 = arith.constant 0 : i32
    %c0_i32_1 = arith.constant 0 : i32
    %c0_i32_2 = arith.constant 0 : i32
    return %c0_i32, %c0_i32_0, %c0_i32_1 : i32, i32, i32
  }
  func.func @transform_7(%arg0: i32, %arg1: i32) -> (i32, i32) {
    %c4_i32 = arith.constant 4 : i32
    %0 = arith.cmpi eq, %arg0, %c4_i32 : i32
    %c0_i32 = arith.constant 0 : i32
    %1 = arith.select %0, %arg1, %c0_i32 : i32
    %c0_i32_0 = arith.constant 0 : i32
    %c0_i32_1 = arith.constant 0 : i32
    return %c0_i32_0, %1 : i32, i32
  }
}

</mosaic_0001>

<llo_original>
// kernel: tpu_custom_call.1
$region0: #{tpu_custom_call.1}
  #allocation0 [shape = 'u32[]', space=smem, size = 0x4, offset = 0x4, fixed_abs, tag = 'smem constant byte address 0x4 - core index']
  #allocation1 [shape = 'u32[144,128]{1,0:T(1,128)}', space=vmem, size = 0x12000, scoped, tag = 'internal scratch']
  #allocation2 [shape = 'bf16[4,16,256]{2,1,0:T(16,128)(2,1)}', space=vmem, size = 0x8000, scoped, tag = 'scratch operand']
  #allocation3 [shape = 'f32[2,16,256]{2,1,0:T(8,128)}', space=vmem, size = 0x8000, scoped, tag = 'scratch operand']
  %s0 = inlined_call_operand.vmem [shape: f32[5], index: 0, kind: input, shape index: {}]
  %s1 = inlined_call_operand.hbm [shape: bf16[32,512], index: 1, kind: input, shape index: {}]
  %s2 = inlined_call_operand.vmem [shape: bf16[32,32], index: 2, kind: input, shape index: {}]
  %s3 = inlined_call_operand.vmem [shape: f32[32,1], index: 3, kind: input, shape index: {}]
  %s4 = inlined_call_operand.vmem [shape: bf16[16,32], index: 4, kind: input, shape index: {}]
  %s5 = inlined_call_operand.vmem [shape: f32[16,1], index: 5, kind: input, shape index: {}]
  %s6 = inlined_call_operand.hbm [shape: bf16[2,512,256], index: 6, kind: input, shape index: {}]
  %s7 = inlined_call_operand.hbm [shape: f32[16,512], index: 7, kind: output, shape index: {}]
  %s8 = sld [smem:[#allocation0]]
  $region85: #{tpu_custom_call.1} parent=0
    _
  %s10 = ssub.s32 1, %s8
  %s11 = scalar_select 0, %s10, %s8
  $region1: #{tpu_custom_call.1} parent=0
    #allocation4 [shape = 'u8[512]{0}', space=smem, size = 0x200, scoped, tag = 'input window, operand 0, single buffered']
    #allocation5 [shape = 's32[2]{0}', space=sflag, size = 0x8, scoped, tag = 'scoped memory for tpu_custom_call.1']
    #allocation6 [shape = 's32[2]{0}', space=sflag, size = 0x8, scoped, tag = 'scoped memory for tpu_custom_call.1']
    #allocation7 [shape = 's32[2]{0}', space=sflag, size = 0x8, scoped, tag = 'scoped memory for tpu_custom_call.1']
    #allocation8 [shape = 'u8[32768]{0}', space=vmem, size = 0x8000, scoped, tag = 'input window, operand 1']
    #allocation9 [shape = 'u8[524288]{0}', space=vmem, size = 0x80000, scoped, tag = 'input window, operand 6, single buffered']
    #allocation10 [shape = 's32[1]{0}', space=sflag, size = 0x4, scoped, tag = 'scoped memory for tpu_custom_call.1']
    #allocation11 [shape = 'u8[32768]{0}', space=vmem, size = 0x8000, scoped, tag = 'output window, operand 0']
    %12 = vsyncpa [#allocation7], 0
    %13 = vsyncpa [#allocation5], 0
    %s14 = scalar_lea.sflag [#allocation5], 1
    %15 = vsyncpa %s14, 0
    %16 = vsyncpa [#allocation10], 0
    %17 = vsyncpa [#allocation6], 0
    %s18 = scalar_lea.sflag [#allocation6], 1
    %19 = vsyncpa %s18, 0
    loop: start=0, step=1, limit=12
    $region2: #{tpu_custom_call.1} parent=1 // loop_pre_header
      _
    $region3: #{tpu_custom_call.1} parent=1 // loop_header
      %s21 = sphi 0, %s25
      %p22 = scmp.ge.s32.totalorder %s21, 12
      %s28 = sphi 0, %s40
      %s29 = sphi 0, %s36
      %s30 = sphi 0, %s28
      %s31 = sphi 0, %s29
      %s32 = sphi 0, %s30
      %s33 = sphi 0, %s31
      %s41 = sphi 0, %s41
      %s43 = sphi 0, %s41
      %s44 = sphi 0, %s43
      %s58 = sphi 0, %s44
      %s68 = sphi 0, %s70
      %s71 = sphi 0, %s68
      %s72 = sphi 0, %s71
      %s88 = sphi 0, %s72
      %s92 = sphi 0, %s92
      %s94 = sphi 0, %s92
      %s95 = sphi 0, %s94
      %s109 = sphi 0, %s95
      %s113 = sphi 0, %s113
      %s115 = sphi 0, %s113
      %s116 = sphi 0, %s115
      %s130 = sphi 0, %s116
      %s134 = sphi 0, %s134
      %s136 = sphi 0, %s134
      %s137 = sphi 0, %s136
      %s151 = sphi 0, %s137
      %s155 = sphi 0, %s155
      %s157 = sphi 0, %s155
      %s158 = sphi 0, %s157
      %s172 = sphi 0, %s158
      %s176 = sphi 0, %s176
      %s178 = sphi 0, %s176
      %s179 = sphi 0, %s178
      %s193 = sphi 0, %s179
      %s203 = sphi 0, %s205
      %s206 = sphi 0, %s203
      %s207 = sphi 0, %s206
      %s223 = sphi 0, %s207
    $region4: #{tpu_custom_call.1} parent=1 // loop_header_branch
      %24 = sbr.rel (%p22) target = $region8
    $region5: #{tpu_custom_call.1} parent=1 // loop_body
      %s26 = ssub.s32 %s21, 1
      %s27 = ssub.s32 %s21, 2
      %s34 = sadd.s32 1, %s29
      %p35 = scmp.ge.s32.totalorder %s34, 2
      %s36 = scalar_select %p35, 0, %s34
      %s37 = sadd.s32 1, %s28
      %s38 = scalar_select %p35, %s37, %s28
      %p39 = scmp.ge.s32.totalorder %s38, 5
      %s40 = scalar_select %p39, 0, %s38
      %s42 = sadd.s32 %s41, 1
      %p45 = scmp.eq.s32.totalorder %s21, 9
      %p46 = scmp.ne.s32.totalorder %s41, %s43
      %p47 = scmp.eq.s32.totalorder %s21, 0
      %p48 = por %p46, %p47
      %p49 = scmp.ne.s32.totalorder %s41, %s43
      %p50 = scmp.eq.s32.totalorder %s26, 9
      %p51 = por %p49, %p50
      %p52 = scmp.ne.s32.totalorder %s43, %s44
      %p53 = scmp.eq.s32.totalorder %s26, 0
      %p54 = por %p52, %p53
      %p55 = scmp.ne.s32.totalorder %s43, %s44
      %p56 = scmp.eq.s32.totalorder %s27, 9
      %p57 = por %p55, %p56
      %p59 = scmp.ne.s32.totalorder %s44, %s58
      %p60 = scmp.eq.s32.totalorder %s27, 0
      %p61 = por %p59, %p60
      %p62 = scmp.eq.s32.totalorder %s28, 0
      %s63 = scalar_select %p62, %s29, 0
      %p64 = scmp.eq.s32.totalorder %s40, 0
      %s65 = scalar_select %p64, %s36, 0
      %s66 = ssub.s32 %s63, %s65
      %p67 = scmp.eq.s32.totalorder %s66, 0
      %s69 = sadd.s32 %s68, 1
      %s70 = scalar_select %p67, %s68, %s69
      %p73 = pneg %p67
      %p74 = scmp.eq.s32.totalorder %s21, 9
      %p75 = por %p73, %p74
      %p76 = scmp.ne.s32.totalorder %s68, %s71
      %p77 = scmp.eq.s32.totalorder %s21, 0
      %p78 = por %p76, %p77
      %p79 = scmp.ne.s32.totalorder %s68, %s71
      %p80 = scmp.eq.s32.totalorder %s26, 9
      %p81 = por %p79, %p80
      %p82 = scmp.ne.s32.totalorder %s71, %s72
      %p83 = scmp.eq.s32.totalorder %s26, 0
      %p84 = por %p82, %p83
      %p85 = scmp.ne.s32.totalorder %s71, %s72
      %p86 = scmp.eq.s32.totalorder %s27, 9
      %p87 = por %p85, %p86
      %p89 = scmp.ne.s32.totalorder %s72, %s88
      %p90 = scmp.eq.s32.totalorder %s27, 0
      %p91 = por %p89, %p90
      %s93 = sadd.s32 %s92, 1
      %p96 = scmp.eq.s32.totalorder %s21, 9
      %p97 = scmp.ne.s32.totalorder %s92, %s94
      %p98 = scmp.eq.s32.totalorder %s21, 0
      %p99 = por %p97, %p98
      %p100 = scmp.ne.s32.totalorder %s92, %s94
      %p101 = scmp.eq.s32.totalorder %s26, 9
      %p102 = por %p100, %p101
      %p103 = scmp.ne.s32.totalorder %s94, %s95
      %p104 = scmp.eq.s32.totalorder %s26, 0
      %p105 = por %p103, %p104
      %p106 = scmp.ne.s32.totalorder %s94, %s95
      %p107 = scmp.eq.s32.totalorder %s27, 9
      %p108 = por %p106, %p107
      %p110 = scmp.ne.s32.totalorder %s95, %s109
      %p111 = scmp.eq.s32.totalorder %s27, 0
      %p112 = por %p110, %p111
      %s114 = sadd.s32 %s113, 1
      %p117 = scmp.eq.s32.totalorder %s21, 9
      %p118 = scmp.ne.s32.totalorder %s113, %s115
      %p119 = scmp.eq.s32.totalorder %s21, 0
      %p120 = por %p118, %p119
      %p121 = scmp.ne.s32.totalorder %s113, %s115
      %p122 = scmp.eq.s32.totalorder %s26, 9
      %p123 = por %p121, %p122
      %p124 = scmp.ne.s32.totalorder %s115, %s116
      %p125 = scmp.eq.s32.totalorder %s26, 0
      %p126 = por %p124, %p125
      %p127 = scmp.ne.s32.totalorder %s115, %s116
      %p128 = scmp.eq.s32.totalorder %s27, 9
      %p129 = por %p127, %p128
      %p131 = scmp.ne.s32.totalorder %s116, %s130
      %p132 = scmp.eq.s32.totalorder %s27, 0
      %p133 = por %p131, %p132
      %s135 = sadd.s32 %s134, 1
      %p138 = scmp.eq.s32.totalorder %s21, 9
      %p139 = scmp.ne.s32.totalorder %s134, %s136
      %p140 = scmp.eq.s32.totalorder %s21, 0
      %p141 = por %p139, %p140
      %p142 = scmp.ne.s32.totalorder %s134, %s136
      %p143 = scmp.eq.s32.totalorder %s26, 9
      %p144 = por %p142, %p143
      %p145 = scmp.ne.s32.totalorder %s136, %s137
      %p146 = scmp.eq.s32.totalorder %s26, 0
      %p147 = por %p145, %p146
      %p148 = scmp.ne.s32.totalorder %s136, %s137
      %p149 = scmp.eq.s32.totalorder %s27, 9
      %p150 = por %p148, %p149
      %p152 = scmp.ne.s32.totalorder %s137, %s151
      %p153 = scmp.eq.s32.totalorder %s27, 0
      %p154 = por %p152, %p153
      %s156 = sadd.s32 %s155, 1
      %p159 = scmp.eq.s32.totalorder %s21, 9
      %p160 = scmp.ne.s32.totalorder %s155, %s157
      %p161 = scmp.eq.s32.totalorder %s21, 0
      %p162 = por %p160, %p161
      %p163 = scmp.ne.s32.totalorder %s155, %s157
      %p164 = scmp.eq.s32.totalorder %s26, 9
      %p165 = por %p163, %p164
      %p166 = scmp.ne.s32.totalorder %s157, %s158
      %p167 = scmp.eq.s32.totalorder %s26, 0
      %p168 = por %p166, %p167
      %p169 = scmp.ne.s32.totalorder %s157, %s158
      %p170 = scmp.eq.s32.totalorder %s27, 9
      %p171 = por %p169, %p170
      %p173 = scmp.ne.s32.totalorder %s158, %s172
      %p174 = scmp.eq.s32.totalorder %s27, 0
      %p175 = por %p173, %p174
      %s177 = sadd.s32 %s176, 1
      %p180 = scmp.eq.s32.totalorder %s21, 9
      %p181 = scmp.ne.s32.totalorder %s176, %s178
      %p182 = scmp.eq.s32.totalorder %s21, 0
      %p183 = por %p181, %p182
      %p184 = scmp.ne.s32.totalorder %s176, %s178
      %p185 = scmp.eq.s32.totalorder %s26, 9
      %p186 = por %p184, %p185
      %p187 = scmp.ne.s32.totalorder %s178, %s179
      %p188 = scmp.eq.s32.totalorder %s26, 0
      %p189 = por %p187, %p188
      %p190 = scmp.ne.s32.totalorder %s178, %s179
      %p191 = scmp.eq.s32.totalorder %s27, 9
      %p192 = por %p190, %p191
      %p194 = scmp.ne.s32.totalorder %s179, %s193
      %p195 = scmp.eq.s32.totalorder %s27, 0
      %p196 = por %p194, %p195
      %p197 = scmp.eq.s32.totalorder %s28, 4
      %s198 = scalar_select %p197, %s29, 0
      %p199 = scmp.eq.s32.totalorder %s40, 4
      %s200 = scalar_select %p199, %s36, 0
      %s201 = ssub.s32 %s198, %s200
      %p202 = scmp.eq.s32.totalorder %s201, 0
      %s204 = sadd.s32 %s203, 1
      %s205 = scalar_select %p202, %s203, %s204
      %p208 = pneg %p202
      %p209 = scmp.eq.s32.totalorder %s21, 9
      %p210 = por %p208, %p209
      %p211 = scmp.ne.s32.totalorder %s203, %s206
      %p212 = scmp.eq.s32.totalorder %s21, 0
      %p213 = por %p211, %p212
      %p214 = scmp.ne.s32.totalorder %s203, %s206
      %p215 = scmp.eq.s32.totalorder %s26, 9
      %p216 = por %p214, %p215
      %p217 = scmp.ne.s32.totalorder %s206, %s207
      %p218 = scmp.eq.s32.totalorder %s26, 0
      %p219 = por %p217, %p218
      %p220 = scmp.ne.s32.totalorder %s206, %s207
      %p221 = scmp.eq.s32.totalorder %s27, 9
      %p222 = por %p220, %p221
      %p224 = scmp.ne.s32.totalorder %s207, %s223
      %p225 = scmp.eq.s32.totalorder %s27, 0
      %p226 = por %p224, %p225
      %p227 = scmp.le.s32.totalorder 1, %s21
      %p228 = scmp.lt.s32.totalorder %s21, 11
      %p229 = pnand %p227, %p228
      %p230 = pneg %p229
      // Predicated region
      $region9: #{tpu_custom_call.1} parent=5 // pred_check
        _
      $region10: #{tpu_custom_call.1} parent=5 // pred_check_branch
        %232 = sbr.rel (%p229) target = $region12
      $region11: #{tpu_custom_call.1} parent=5 // pred_region
        %s233 = ssub.s32 %s21, 1
        // Predicated region
        $region13: #{tpu_custom_call.1} parent=11 // pred_check
          %p234 = pneg %p54
        $region14: #{tpu_custom_call.1} parent=11 // pred_check_branch
          %236 = sbr.rel (%p234) target = $region16
        $region15: #{tpu_custom_call.1} parent=11 // pred_region
          %s238 = ssub.s32 16, 16
          %239 = vsyncadd [#allocation7], %s238
          %s241 = sshll.u32 %s0, 4
          %s242 = int_to_ptr.vmem [resolvable:$true] %s241
          %244 = dma.vmem_to_smem %s242, 16, [#allocation4], [#allocation7]
        $region16: #{tpu_custom_call.1} parent=11 // pred_fallthru
          _
        // Predicated region
        $region17: #{tpu_custom_call.1} parent=11 // pred_check
          %p245 = pneg %p105
        $region18: #{tpu_custom_call.1} parent=11 // pred_check_branch
          %247 = sbr.rel (%p245) target = $region20
        $region19: #{tpu_custom_call.1} parent=11 // pred_region
          _
        $region20: #{tpu_custom_call.1} parent=11 // pred_fallthru
          _
        // Predicated region
        $region21: #{tpu_custom_call.1} parent=11 // pred_check
          %p248 = pneg %p126
        $region22: #{tpu_custom_call.1} parent=11 // pred_check_branch
          %250 = sbr.rel (%p248) target = $region24
        $region23: #{tpu_custom_call.1} parent=11 // pred_region
          _
        $region24: #{tpu_custom_call.1} parent=11 // pred_fallthru
          _
        // Predicated region
        $region25: #{tpu_custom_call.1} parent=11 // pred_check
          %p251 = pneg %p147
        $region26: #{tpu_custom_call.1} parent=11 // pred_check_branch
          %253 = sbr.rel (%p251) target = $region28
        $region27: #{tpu_custom_call.1} parent=11 // pred_region
          _
        $region28: #{tpu_custom_call.1} parent=11 // pred_fallthru
          _
        // Predicated region
        $region29: #{tpu_custom_call.1} parent=11 // pred_check
          %p254 = pneg %p168
        $region30: #{tpu_custom_call.1} parent=11 // pred_check_branch
          %256 = sbr.rel (%p254) target = $region32
        $region31: #{tpu_custom_call.1} parent=11 // pred_region
          _
        $region32: #{tpu_custom_call.1} parent=11 // pred_fallthru
          _
        // Predicated region
        $region33: #{tpu_custom_call.1} parent=11 // pred_check
          %p257 = pneg %p189
        $region34: #{tpu_custom_call.1} parent=11 // pred_check_branch
          %259 = sbr.rel (%p257) target = $region36
        $region35: #{tpu_custom_call.1} parent=11 // pred_region
          %s261 = ssub.s32 16384, 16384
          %262 = vsyncadd [#allocation10], %s261
          %s263 = sshll.u32 [#allocation9], 4
          %s264 = int_to_ptr.vmem [resolvable:$true] %s263
          %269 = dma.hbm_to_vmem [thread:$0]  %s6, 16384, %s264, [#allocation10], 128, 128, 8
        $region36: #{tpu_custom_call.1} parent=11 // pred_fallthru
          _
      $region12: #{tpu_custom_call.1} parent=5 // pred_fallthru
        _
      %p270 = scmp.lt.s32.totalorder %s21, 10
      // Predicated region
      $region37: #{tpu_custom_call.1} parent=5 // pred_check
        %p271 = pneg %p270
      $region38: #{tpu_custom_call.1} parent=5 // pred_check_branch
        %273 = sbr.rel (%p271) target = $region40
      $region39: #{tpu_custom_call.1} parent=5 // pred_region
        // Predicated region
        $region41: #{tpu_custom_call.1} parent=39 // pred_check
          %p274 = pneg %p78
        $region42: #{tpu_custom_call.1} parent=39 // pred_check_branch
          %276 = sbr.rel (%p274) target = $region44
        $region43: #{tpu_custom_call.1} parent=39 // pred_region
          %s277 = sand.u32 %s68, 1
          %s278 = scalar_lea.sflag [#allocation5], %s277
          %s279 = sand.u32 %s68, 1
          %s280 = smul.addr %s279, 32
          %s281 = scalar_lea.vmem [#allocation8], %s280
          %p282 = scmp.eq.s32.totalorder %s28, 0
          %s283 = scalar_select %p282, %s29, 0
          %s284 = smul.u32 2, %s283
          %s286 = ssub.s32 512, 512
          %287 = vsyncadd %s278, %s286
          %s288 = smul.addr %s284, 64
          %s289 = scalar_lea.hbm %s1, %s288
          %s290 = sshll.u32 %s281, 4
          %s291 = int_to_ptr.vmem [resolvable:$true] %s290
          %296 = dma.hbm_to_vmem [thread:$0]  %s289, 512, %s291, %s278, 256, 128, 8
        $region44: #{tpu_custom_call.1} parent=39 // pred_fallthru
          _
      $region40: #{tpu_custom_call.1} parent=5 // pred_fallthru
        _
      %p297 = scmp.le.s32.totalorder 1, %s21
      %p298 = scmp.lt.s32.totalorder %s21, 11
      %p299 = pnand %p297, %p298
      %p300 = pneg %p299
      // Predicated region
      $region45: #{tpu_custom_call.1} parent=5 // pred_check
        _
      $region46: #{tpu_custom_call.1} parent=5 // pred_check_branch
        %302 = sbr.rel (%p299) target = $region48
      $region47: #{tpu_custom_call.1} parent=5 // pred_region
        %s303 = ssub.s32 %s21, 1
        // Predicated region
        $region49: #{tpu_custom_call.1} parent=47 // pred_check
          %p304 = pneg %p54
        $region50: #{tpu_custom_call.1} parent=47 // pred_check_branch
          %306 = sbr.rel (%p304) target = $region52
        $region51: #{tpu_custom_call.1} parent=47 // pred_region
          %307 = dma.done [#allocation7], 16
        $region52: #{tpu_custom_call.1} parent=47 // pred_fallthru
          _
        %s308 = sand.u32 %s71, 1
        %s309 = scalar_lea.sflag [#allocation5], %s308
        %s310 = sand.u32 %s71, 1
        %s311 = smul.addr %s310, 32
        %s312 = scalar_lea.vmem [#allocation8], %s311
        // Predicated region
        $region53: #{tpu_custom_call.1} parent=47 // pred_check
          %p313 = pneg %p84
        $region54: #{tpu_custom_call.1} parent=47 // pred_check_branch
          %315 = sbr.rel (%p313) target = $region56
        $region55: #{tpu_custom_call.1} parent=47 // pred_region
          %316 = dma.done %s309, 512
        $region56: #{tpu_custom_call.1} parent=47 // pred_fallthru
          _
        // Predicated region
        $region57: #{tpu_custom_call.1} parent=47 // pred_check
          %p317 = pneg %p189
        $region58: #{tpu_custom_call.1} parent=47 // pred_check_branch
          %319 = sbr.rel (%p317) target = $region60
        $region59: #{tpu_custom_call.1} parent=47 // pred_region
          %320 = dma.done [#allocation10], 16384
        $region60: #{tpu_custom_call.1} parent=47 // pred_fallthru
          _
        %321 = sfence
        %p322 = pneg %p54
        %p323 = pneg %p51
        %s324 = sand.u32 %s71, 1
        %s325 = scalar_lea.sflag [#allocation5], %s324
        %s326 = sand.u32 %s71, 1
        %s327 = smul.addr %s326, 32
        %s328 = scalar_lea.vmem [#allocation8], %s327
        %p329 = pneg %p84
        %p330 = pneg %p81
        %p331 = pneg %p105
        %p332 = pneg %p102
        %p333 = pneg %p126
        %p334 = pneg %p123
        %p335 = pneg %p147
        %p336 = pneg %p144
        %p337 = pneg %p168
        %p338 = pneg %p165
        %p339 = pneg %p189
        %p340 = pneg %p186
        %p341 = pneg %p219
        %p342 = pneg %p216
        %s343 = sand.u32 %s206, 1
        %s344 = scalar_lea.sflag [#allocation6], %s343
        %s345 = sand.u32 %s206, 1
        %s346 = smul.addr %s345, 32
        %s347 = scalar_lea.vmem [#allocation11], %s346
        %p348 = scmp.eq.s32.totalorder %s30, 0
        %s349 = scalar_select %p348, %s31, 0
        %s350 = smul.u32 2, %s349
        %p351 = scmp.eq.s32.totalorder %s30, 4
        %s352 = scalar_select %p351, %s31, 0
        %s353 = smul.u32 2, %s352
        %s355 = sld [smem:[#allocation4 + %s30]]
        %p356 = scmp.lt.s32.totalorder %s30, 0
        %s357 = ssub.s32 0, %s30
        %s358 = scalar_select %p356, %s357, %s30
        %s359 = sand.u32 %s358, 1
        %s360 = ssub.s32 0, %s359
        %s361 = scalar_select %p356, %s360, %s359
        %s362 = smul.u32 %s361, 2
        %s363 = sadd.s32 %s30, 1
        %p364 = scmp.lt.s32.totalorder %s363, 0
        %s365 = ssub.s32 0, %s363
        %s366 = scalar_select %p364, %s365, %s363
        %s367 = sand.u32 %s366, 1
        %s368 = ssub.s32 0, %s367
        %s369 = scalar_select %p364, %s368, %s367
        %s370 = smul.u32 %s369, 2
        %p371 = scmp.eq.s32.totalorder %s30, 0
        // Predicated region
        $region61: #{tpu_custom_call.1} parent=47 // pred_check
          %p372 = pneg %p371
        $region62: #{tpu_custom_call.1} parent=47 // pred_check_branch
          %374 = sbr.rel (%p372) target = $region64
        $region63: #{tpu_custom_call.1} parent=47 // pred_region
          %v375 = vld [vmem:[%s2] sm:$0xf]
          %v376 = vld [vmem:[%s2 + $0x4] sm:$0xf]
          %v377 = vld [vmem:[%s2 + $0x8] sm:$0xf]
          %v378 = vld [vmem:[%s2 + $0xc] sm:$0xf]
          %v379 = vld [vmem:[%s312] sm:$0xff]
          %v380 = vld [vmem:[%s312 + $0x8] sm:$0xff]
          %v381 = vld [vmem:[%s312 + $0x10] sm:$0xff]
          %v382 = vld [vmem:[%s312 + $0x18] sm:$0xff]
          %v383 = vld [vmem:[%s3] sm:$0xff]
          %v384 = vld [vmem:[%s3 + $0x8] sm:$0xff]
          %v385 = vld [vmem:[%s3 + $0x10] sm:$0xff]
          %v386 = vld [vmem:[%s3 + $0x18] sm:$0xff]
          %388 = vset.pattern.permute.xlu0 0
          %389 = vperm.xlu0 %388, %v383
          %v390 = vpop.permute.xlu0 %389
          %393 = vset.pattern.permute.xlu0 0
          %394 = vperm.xlu0 %393, %v384
          %v395 = vpop.permute.xlu0 %394
          %398 = vset.pattern.permute.xlu0 0
          %399 = vperm.xlu0 %398, %v385
          %v400 = vpop.permute.xlu0 %399
          %403 = vset.pattern.permute.xlu0 0
          %404 = vperm.xlu0 %403, %v386
          %v405 = vpop.permute.xlu0 %404
          %v411 = vunpack.c.l.b16 %v375
          %v412 = vunpack.c.l.b16 %v376
          %v413 = vunpack.c.l.b16 %v377
          %v414 = vunpack.c.l.b16 %v378
          %v415 = vpack.c.b16 %v412, %v411
          %v416 = vpack.c.b16 %v414, %v413
          %v421 = vunpack.c.l.b16 %v379
          %v422 = vunpack.c.h.b16 %v379
          %v423 = vunpack.c.l.b16 %v380
          %v424 = vunpack.c.h.b16 %v380
          %v425 = vunpack.c.l.b16 %v381
          %v426 = vunpack.c.h.b16 %v381
          %v427 = vunpack.c.l.b16 %v382
          %v428 = vunpack.c.h.b16 %v382
          %v429 = vpack.c.b16 %v423, %v421
          %v430 = vpack.c.b16 %v424, %v422
          %v431 = vpack.c.b16 %v427, %v425
          %v432 = vpack.c.b16 %v428, %v426
          %vm437 = vcmask 261120
          %v439 = vsel %vm437, %v415, 0
          %v442 = vsel %vm437, %v416, 0
          %444 = vmatprep.subr.bf16.mxu0 %v430
          %445 = vmatpush1.bf16.msra.mxu0 %v429
          %446 = vmatprep.subr.bf16.mxu0 %v432
          %447 = vmatpush1.bf16.msra.mxu0 %v431
          %448 = vmatprep.subr.bf16.mxu0 0
          %449 = vmatpush1.bf16.msra.mxu0 0
          %450 = vmatprep.subr.bf16.mxu0 0
          %451 = vmatpush1.bf16.msra.mxu0 0
          %452 = vmatprep.subr.bf16.mxu0 0
          %453 = vmatpush1.bf16.msra.mxu0 0
          %454 = vmatprep.subr.bf16.mxu0 0
          %455 = vmatpush1.bf16.msra.mxu0 0
          %456 = vmatprep.subr.bf16.mxu0 0
          %457 = vmatpush1.bf16.msra.mxu0 0
          %458 = vmatprep.subr.bf16.mxu0 0
          %459 = vmatpush1.bf16.msra.mxu0 0
          %460 = vmatprep.subr.bf16.mxu0 0
          %461 = vmatpush1.bf16.msra.mxu0 0
          %462 = vmatprep.subr.bf16.mxu0 0
          %463 = vmatpush1.bf16.msra.mxu0 0
          %464 = vmatprep.subr.bf16.mxu0 0
          %465 = vmatpush1.bf16.msra.mxu0 0
          %466 = vmatprep.subr.bf16.mxu0 0
          %467 = vmatpush1.bf16.msra.mxu0 0
          %468 = vmatprep.subr.bf16.mxu0 0
          %469 = vmatpush1.bf16.msra.mxu0 0
          %470 = vmatprep.subr.bf16.mxu0 0
          %471 = vmatpush1.bf16.msra.mxu0 0
          %472 = vmatprep.subr.bf16.mxu0 0
          %473 = vmatpush1.bf16.msra.mxu0 0
          %474 = vmatprep.subr.bf16.mxu0 0
          %475 = vmatpush1.bf16.msra.mxu0 0
          %476 = vmatprep.mubr.bf16.mxu0 0
          %477 = vmatmul.mubr.bf16.gmra.mrb[0].mxu0 %v439
          %v478 = vpop.f32.mrb[0].mxu0
          %v479 = vadd.f32 %v390, %v478
          %v480 = vpop.f32.mrb[0].mxu0
          %v481 = vadd.f32 %v390, %v480
          %v482 = vpop.f32.mrb[0].mxu0
          %v483 = vadd.f32 %v395, %v482
          %v484 = vpop.f32.mrb[0].mxu0
          %v485 = vadd.f32 %v395, %v484
          %486 = vmatprep.mubr.bf16.mxu0 0
          %487 = vmatmul.mubr.bf16.gmra.mrb[0].mxu0 %v442
          %v488 = vpop.f32.mrb[0].mxu0
          %v489 = vadd.f32 %v400, %v488
          %v490 = vpop.f32.mrb[0].mxu0
          %v491 = vadd.f32 %v400, %v490
          %v492 = vpop.f32.mrb[0].mxu0
          %v493 = vadd.f32 %v405, %v492
          %v494 = vpop.f32.mrb[0].mxu0
          %v495 = vadd.f32 %v405, %v494
          %496 = vdwg.mxu0
          %v497 = vmax.f32 %v479, 0.0
          %v498 = vmax.f32 %v481, 0.0
          %v499 = vmax.f32 %v483, 0.0
          %v500 = vmax.f32 %v485, 0.0
          %v501 = vmax.f32 %v489, 0.0
          %v502 = vmax.f32 %v491, 0.0
          %v503 = vmax.f32 %v493, 0.0
          %v504 = vmax.f32 %v495, 0.0
          %v505 = vld [vmem:[%s4] sm:$0xf]
          %v506 = vld [vmem:[%s4 + $0x4] sm:$0xf]
          %v507 = vpack.c.bf16 %v499, %v497
          %v508 = vpack.c.bf16 %v500, %v498
          %v509 = vpack.c.bf16 %v503, %v501
          %v510 = vpack.c.bf16 %v504, %v502
          %v511 = vld [vmem:[%s5] sm:$0xff]
          %v512 = vld [vmem:[%s5 + $0x8] sm:$0xff]
          %514 = vset.pattern.permute.xlu0 0
          %515 = vperm.xlu0 %514, %v511
          %v516 = vpop.permute.xlu0 %515
          %519 = vset.pattern.permute.xlu0 0
          %520 = vperm.xlu0 %519, %v512
          %v521 = vpop.permute.xlu0 %520
          %v525 = vunpack.c.l.b16 %v505
          %v526 = vunpack.c.l.b16 %v506
          %v527 = vpack.c.b16 %v526, %v525
          %v529 = vsel %vm437, %v527, 0
          %531 = vmatprep.subr.bf16.mxu0 %v508
          %532 = vmatpush1.bf16.msra.mxu0 %v507
          %533 = vmatprep.subr.bf16.mxu0 %v510
          %534 = vmatpush1.bf16.msra.mxu0 %v509
          %535 = vmatprep.subr.bf16.mxu0 0
          %536 = vmatpush1.bf16.msra.mxu0 0
          %537 = vmatprep.subr.bf16.mxu0 0
          %538 = vmatpush1.bf16.msra.mxu0 0
          %539 = vmatprep.subr.bf16.mxu0 0
          %540 = vmatpush1.bf16.msra.mxu0 0
          %541 = vmatprep.subr.bf16.mxu0 0
          %542 = vmatpush1.bf16.msra.mxu0 0
          %543 = vmatprep.subr.bf16.mxu0 0
          %544 = vmatpush1.bf16.msra.mxu0 0
          %545 = vmatprep.subr.bf16.mxu0 0
          %546 = vmatpush1.bf16.msra.mxu0 0
          %547 = vmatprep.subr.bf16.mxu0 0
          %548 = vmatpush1.bf16.msra.mxu0 0
          %549 = vmatprep.subr.bf16.mxu0 0
          %550 = vmatpush1.bf16.msra.mxu0 0
          %551 = vmatprep.subr.bf16.mxu0 0
          %552 = vmatpush1.bf16.msra.mxu0 0
          %553 = vmatprep.subr.bf16.mxu0 0
          %554 = vmatpush1.bf16.msra.mxu0 0
          %555 = vmatprep.subr.bf16.mxu0 0
          %556 = vmatpush1.bf16.msra.mxu0 0
          %557 = vmatprep.subr.bf16.mxu0 0
          %558 = vmatpush1.bf16.msra.mxu0 0
          %559 = vmatprep.subr.bf16.mxu0 0
          %560 = vmatpush1.bf16.msra.mxu0 0
          %561 = vmatprep.subr.bf16.mxu0 0
          %562 = vmatpush1.bf16.msra.mxu0 0
          %563 = vmatprep.mubr.bf16.mxu0 0
          %564 = vmatmul.mubr.bf16.gmra.mrb[0].mxu0 %v529
          %v565 = vpop.f32.mrb[0].mxu0
          %v566 = vadd.f32 %v516, %v565
          %v567 = vpop.f32.mrb[0].mxu0
          %v568 = vadd.f32 %v516, %v567
          %v569 = vpop.f32.mrb[0].mxu0
          %v570 = vadd.f32 %v521, %v569
          %v571 = vpop.f32.mrb[0].mxu0
          %v572 = vadd.f32 %v521, %v571
          %573 = vdwg.mxu0
          %v574 = vpack.c.bf16 %v570, %v566
          %v575 = vpack.c.bf16 %v572, %v568
          %s576 = sadd.s32 %s362, %s31
          %s577 = smul.u32 %s576, 2
          %s578 = smul.addr %s577, 8
          %s579 = scalar_lea.vmem [#allocation2], %s578
          %580 = vst [vmem:[%s579] sm:$0xff] %v574
          %581 = vst [vmem:[%s579 + $0x8] sm:$0xff] %v575
          %v582 = vstv %s355
          %v583 = vmul.f32 %v582, %v566
          %v584 = vmul.f32 %v582, %v568
          %v585 = vmul.f32 %v582, %v570
          %v586 = vmul.f32 %v582, %v572
          %s587 = smul.u32 %s31, 4
          %s588 = smul.addr %s587, 8
          %s589 = scalar_lea.vmem [#allocation3], %s588
          %590 = vst [vmem:[%s589] sm:$0xff] %v583
          %591 = vst [vmem:[%s589 + $0x8] sm:$0xff] %v584
          %592 = vst [vmem:[%s589 + $0x10] sm:$0xff] %v585
          %593 = vst [vmem:[%s589 + $0x18] sm:$0xff] %v586
        $region64: #{tpu_custom_call.1} parent=47 // pred_fallthru
          _
        %p594 = scmp.gt.s32.totalorder %s30, 0
        // Predicated region
        $region65: #{tpu_custom_call.1} parent=47 // pred_check
          %p595 = pneg %p594
        $region66: #{tpu_custom_call.1} parent=47 // pred_check_branch
          %597 = sbr.rel (%p595) target = $region68
        $region67: #{tpu_custom_call.1} parent=47 // pred_region
          %s598 = smul.u32 %s31, 128
          %s599 = smul.addr %s598, 4
          %s600 = scalar_lea.vmem [#allocation9], %s599
          %v601 = vld [vmem:[%s600] sm:$0xff]
          %v602 = vld [vmem:[%s600 + $0x8] sm:$0xff]
          %v603 = vld [vmem:[%s600 + $0x10] sm:$0xff]
          %v604 = vld [vmem:[%s600 + $0x18] sm:$0xff]
          %v605 = vld [vmem:[%s600 + $0x20] sm:$0xff]
          %v606 = vld [vmem:[%s600 + $0x28] sm:$0xff]
          %v607 = vld [vmem:[%s600 + $0x30] sm:$0xff]
          %v608 = vld [vmem:[%s600 + $0x38] sm:$0xff]
          %v609 = vld [vmem:[%s600 + $0x40] sm:$0xff]
          %v610 = vld [vmem:[%s600 + $0x48] sm:$0xff]
          %v611 = vld [vmem:[%s600 + $0x50] sm:$0xff]
          %v612 = vld [vmem:[%s600 + $0x58] sm:$0xff]
          %v613 = vld [vmem:[%s600 + $0x60] sm:$0xff]
          %v614 = vld [vmem:[%s600 + $0x68] sm:$0xff]
          %v615 = vld [vmem:[%s600 + $0x70] sm:$0xff]
          %v616 = vld [vmem:[%s600 + $0x78] sm:$0xff]
          %v617 = vld [vmem:[%s600 + $0x80] sm:$0xff]
          %v618 = vld [vmem:[%s600 + $0x88] sm:$0xff]
          %v619 = vld [vmem:[%s600 + $0x90] sm:$0xff]
          %v620 = vld [vmem:[%s600 + $0x98] sm:$0xff]
          %v621 = vld [vmem:[%s600 + $0xa0] sm:$0xff]
          %v622 = vld [vmem:[%s600 + $0xa8] sm:$0xff]
          %v623 = vld [vmem:[%s600 + $0xb0] sm:$0xff]
          %v624 = vld [vmem:[%s600 + $0xb8] sm:$0xff]
          %v625 = vld [vmem:[%s600 + $0xc0] sm:$0xff]
          %v626 = vld [vmem:[%s600 + $0xc8] sm:$0xff]
          %v627 = vld [vmem:[%s600 + $0xd0] sm:$0xff]
          %v628 = vld [vmem:[%s600 + $0xd8] sm:$0xff]
          %v629 = vld [vmem:[%s600 + $0xe0] sm:$0xff]
          %v630 = vld [vmem:[%s600 + $0xe8] sm:$0xff]
          %v631 = vld [vmem:[%s600 + $0xf0] sm:$0xff]
          %v632 = vld [vmem:[%s600 + $0xf8] sm:$0xff]
          %s633 = smul.u32 %s370, 2
          %s634 = smul.addr %s633, 8
          %s635 = scalar_lea.vmem [#allocation2], %s634
          %v636 = vld [vmem:[%s635] sm:$0xff]
          %v637 = vld [vmem:[%s635 + $0x8] sm:$0xff]
          %v638 = vld [vmem:[%s600 + $0x100] sm:$0xff]
          %v639 = vld [vmem:[%s600 + $0x108] sm:$0xff]
          %v640 = vld [vmem:[%s600 + $0x110] sm:$0xff]
          %v641 = vld [vmem:[%s600 + $0x118] sm:$0xff]
          %v642 = vld [vmem:[%s600 + $0x120] sm:$0xff]
          %v643 = vld [vmem:[%s600 + $0x128] sm:$0xff]
          %v644 = vld [vmem:[%s600 + $0x130] sm:$0xff]
          %v645 = vld [vmem:[%s600 + $0x138] sm:$0xff]
          %v646 = vld [vmem:[%s600 + $0x140] sm:$0xff]
          %v647 = vld [vmem:[%s600 + $0x148] sm:$0xff]
          %v648 = vld [vmem:[%s600 + $0x150] sm:$0xff]
          %v649 = vld [vmem:[%s600 + $0x158] sm:$0xff]
          %v650 = vld [vmem:[%s600 + $0x160] sm:$0xff]
          %v651 = vld [vmem:[%s600 + $0x168] sm:$0xff]
          %v652 = vld [vmem:[%s600 + $0x170] sm:$0xff]
          %v653 = vld [vmem:[%s600 + $0x178] sm:$0xff]
          %v654 = vld [vmem:[%s600 + $0x180] sm:$0xff]
          %v655 = vld [vmem:[%s600 + $0x188] sm:$0xff]
          %v656 = vld [vmem:[%s600 + $0x190] sm:$0xff]
          %v657 = vld [vmem:[%s600 + $0x198] sm:$0xff]
          %v658 = vld [vmem:[%s600 + $0x1a0] sm:$0xff]
          %v659 = vld [vmem:[%s600 + $0x1a8] sm:$0xff]
          %v660 = vld [vmem:[%s600 + $0x1b0] sm:$0xff]
          %v661 = vld [vmem:[%s600 + $0x1b8] sm:$0xff]
          %v662 = vld [vmem:[%s600 + $0x1c0] sm:$0xff]
          %v663 = vld [vmem:[%s600 + $0x1c8] sm:$0xff]
          %v664 = vld [vmem:[%s600 + $0x1d0] sm:$0xff]
          %v665 = vld [vmem:[%s600 + $0x1d8] sm:$0xff]
          %v666 = vld [vmem:[%s600 + $0x1e0] sm:$0xff]
          %v667 = vld [vmem:[%s600 + $0x1e8] sm:$0xff]
          %v668 = vld [vmem:[%s600 + $0x1f0] sm:$0xff]
          %v669 = vld [vmem:[%s600 + $0x1f8] sm:$0xff]
          %s670 = sadd.s32 %s370, 1
          %s671 = smul.u32 %s670, 2
          %s672 = smul.addr %s671, 8
          %s673 = scalar_lea.vmem [#allocation2], %s672
          %v674 = vld [vmem:[%s673] sm:$0xff]
          %v675 = vld [vmem:[%s673 + $0x8] sm:$0xff]
          %v708 = vunpack.c.l.b16 %v638
          %v709 = vunpack.c.h.b16 %v638
          %v710 = vunpack.c.l.b16 %v639
          %v711 = vunpack.c.h.b16 %v639
          %v712 = vunpack.c.l.b16 %v640
          %v713 = vunpack.c.h.b16 %v640
          %v714 = vunpack.c.l.b16 %v641
          %v715 = vunpack.c.h.b16 %v641
          %v716 = vunpack.c.l.b16 %v642
          %v717 = vunpack.c.h.b16 %v642
          %v718 = vunpack.c.l.b16 %v643
          %v719 = vunpack.c.h.b16 %v643
          %v720 = vunpack.c.l.b16 %v644
          %v721 = vunpack.c.h.b16 %v644
          %v722 = vunpack.c.l.b16 %v645
          %v723 = vunpack.c.h.b16 %v645
          %v724 = vunpack.c.l.b16 %v646
          %v725 = vunpack.c.h.b16 %v646
          %v726 = vunpack.c.l.b16 %v647
          %v727 = vunpack.c.h.b16 %v647
          %v728 = vunpack.c.l.b16 %v648
          %v729 = vunpack.c.h.b16 %v648
          %v730 = vunpack.c.l.b16 %v649
          %v731 = vunpack.c.h.b16 %v649
          %v732 = vunpack.c.l.b16 %v650
          %v733 = vunpack.c.h.b16 %v650
          %v734 = vunpack.c.l.b16 %v651
          %v735 = vunpack.c.h.b16 %v651
          %v736 = vunpack.c.l.b16 %v652
          %v737 = vunpack.c.h.b16 %v652
          %v738 = vunpack.c.l.b16 %v653
          %v739 = vunpack.c.h.b16 %v653
          %v740 = vunpack.c.l.b16 %v654
          %v741 = vunpack.c.h.b16 %v654
          %v742 = vunpack.c.l.b16 %v655
          %v743 = vunpack.c.h.b16 %v655
          %v744 = vunpack.c.l.b16 %v656
          %v745 = vunpack.c.h.b16 %v656
          %v746 = vunpack.c.l.b16 %v657
          %v747 = vunpack.c.h.b16 %v657
          %v748 = vunpack.c.l.b16 %v658
          %v749 = vunpack.c.h.b16 %v658
          %v750 = vunpack.c.l.b16 %v659
          %v751 = vunpack.c.h.b16 %v659
          %v752 = vunpack.c.l.b16 %v660
          %v753 = vunpack.c.h.b16 %v660
          %v754 = vunpack.c.l.b16 %v661
          %v755 = vunpack.c.h.b16 %v661
          %v756 = vunpack.c.l.b16 %v662
          %v757 = vunpack.c.h.b16 %v662
          %v758 = vunpack.c.l.b16 %v663
          %v759 = vunpack.c.h.b16 %v663
          %v760 = vunpack.c.l.b16 %v664
          %v761 = vunpack.c.h.b16 %v664
          %v762 = vunpack.c.l.b16 %v665
          %v763 = vunpack.c.h.b16 %v665
          %v764 = vunpack.c.l.b16 %v666
          %v765 = vunpack.c.h.b16 %v666
          %v766 = vunpack.c.l.b16 %v667
          %v767 = vunpack.c.h.b16 %v667
          %v768 = vunpack.c.l.b16 %v668
          %v769 = vunpack.c.h.b16 %v668
          %v770 = vunpack.c.l.b16 %v669
          %v771 = vunpack.c.h.b16 %v669
          %v772 = vpack.c.b16 %v710, %v708
          %v773 = vpack.c.b16 %v711, %v709
          %v774 = vpack.c.b16 %v714, %v712
          %v775 = vpack.c.b16 %v715, %v713
          %v776 = vpack.c.b16 %v718, %v716
          %v777 = vpack.c.b16 %v719, %v717
          %v778 = vpack.c.b16 %v722, %v720
          %v779 = vpack.c.b16 %v723, %v721
          %v780 = vpack.c.b16 %v726, %v724
          %v781 = vpack.c.b16 %v727, %v725
          %v782 = vpack.c.b16 %v730, %v728
          %v783 = vpack.c.b16 %v731, %v729
          %v784 = vpack.c.b16 %v734, %v732
          %v785 = vpack.c.b16 %v735, %v733
          %v786 = vpack.c.b16 %v738, %v736
          %v787 = vpack.c.b16 %v739, %v737
          %v788 = vpack.c.b16 %v742, %v740
          %v789 = vpack.c.b16 %v743, %v741
          %v790 = vpack.c.b16 %v746, %v744
          %v791 = vpack.c.b16 %v747, %v745
          %v792 = vpack.c.b16 %v750, %v748
          %v793 = vpack.c.b16 %v751, %v749
          %v794 = vpack.c.b16 %v754, %v752
          %v795 = vpack.c.b16 %v755, %v753
          %v796 = vpack.c.b16 %v758, %v756
          %v797 = vpack.c.b16 %v759, %v757
          %v798 = vpack.c.b16 %v762, %v760
          %v799 = vpack.c.b16 %v763, %v761
          %v800 = vpack.c.b16 %v766, %v764
          %v801 = vpack.c.b16 %v767, %v765
          %v802 = vpack.c.b16 %v770, %v768
          %v803 = vpack.c.b16 %v771, %v769
          %836 = vmatprep.subr.bf16.mxu0 %v773
          %837 = vmatpush1.bf16.msra.mxu0 %v772
          %838 = vmatprep.subr.bf16.mxu0 %v775
          %839 = vmatpush1.bf16.msra.mxu0 %v774
          %840 = vmatprep.subr.bf16.mxu0 %v777
          %841 = vmatpush1.bf16.msra.mxu0 %v776
          %842 = vmatprep.subr.bf16.mxu0 %v779
          %843 = vmatpush1.bf16.msra.mxu0 %v778
          %844 = vmatprep.subr.bf16.mxu0 %v781
          %845 = vmatpush1.bf16.msra.mxu0 %v780
          %846 = vmatprep.subr.bf16.mxu0 %v783
          %847 = vmatpush1.bf16.msra.mxu0 %v782
          %848 = vmatprep.subr.bf16.mxu0 %v785
          %849 = vmatpush1.bf16.msra.mxu0 %v784
          %850 = vmatprep.subr.bf16.mxu0 %v787
          %851 = vmatpush1.bf16.msra.mxu0 %v786
          %852 = vmatprep.subr.bf16.mxu0 %v789
          %853 = vmatpush1.bf16.msra.mxu0 %v788
          %854 = vmatprep.subr.bf16.mxu0 %v791
          %855 = vmatpush1.bf16.msra.mxu0 %v790
          %856 = vmatprep.subr.bf16.mxu0 %v793
          %857 = vmatpush1.bf16.msra.mxu0 %v792
          %858 = vmatprep.subr.bf16.mxu0 %v795
          %859 = vmatpush1.bf16.msra.mxu0 %v794
          %860 = vmatprep.subr.bf16.mxu0 %v797
          %861 = vmatpush1.bf16.msra.mxu0 %v796
          %862 = vmatprep.subr.bf16.mxu0 %v799
          %863 = vmatpush1.bf16.msra.mxu0 %v798
          %864 = vmatprep.subr.bf16.mxu0 %v801
          %865 = vmatpush1.bf16.msra.mxu0 %v800
          %866 = vmatprep.subr.bf16.mxu0 %v803
          %867 = vmatpush1.bf16.msra.mxu0 %v802
          %868 = vmatprep.mubr.bf16.mxu0 %v675
          %869 = vmatmul.mubr.bf16.gmra.mrb[0].mxu0 %v674
          %v870 = vpop.f32.mrb[0].mxu0
          %v871 = vadd.f32 0.0, %v870
          %v872 = vpop.f32.mrb[0].mxu0
          %v873 = vadd.f32 0.0, %v872
          %v874 = vpop.f32.mrb[0].mxu0
          %v875 = vadd.f32 0.0, %v874
          %v876 = vpop.f32.mrb[0].mxu0
          %v877 = vadd.f32 0.0, %v876
          %878 = vdwg.mxu0
          %v911 = vunpack.c.l.b16 %v601
          %v912 = vunpack.c.h.b16 %v601
          %v913 = vunpack.c.l.b16 %v602
          %v914 = vunpack.c.h.b16 %v602
          %v915 = vunpack.c.l.b16 %v603
          %v916 = vunpack.c.h.b16 %v603
          %v917 = vunpack.c.l.b16 %v604
          %v918 = vunpack.c.h.b16 %v604
          %v919 = vunpack.c.l.b16 %v605
          %v920 = vunpack.c.h.b16 %v605
          %v921 = vunpack.c.l.b16 %v606
          %v922 = vunpack.c.h.b16 %v606
          %v923 = vunpack.c.l.b16 %v607
          %v924 = vunpack.c.h.b16 %v607
          %v925 = vunpack.c.l.b16 %v608
          %v926 = vunpack.c.h.b16 %v608
          %v927 = vunpack.c.l.b16 %v609
          %v928 = vunpack.c.h.b16 %v609
          %v929 = vunpack.c.l.b16 %v610
          %v930 = vunpack.c.h.b16 %v610
          %v931 = vunpack.c.l.b16 %v611
          %v932 = vunpack.c.h.b16 %v611
          %v933 = vunpack.c.l.b16 %v612
          %v934 = vunpack.c.h.b16 %v612
          %v935 = vunpack.c.l.b16 %v613
          %v936 = vunpack.c.h.b16 %v613
          %v937 = vunpack.c.l.b16 %v614
          %v938 = vunpack.c.h.b16 %v614
          %v939 = vunpack.c.l.b16 %v615
          %v940 = vunpack.c.h.b16 %v615
          %v941 = vunpack.c.l.b16 %v616
          %v942 = vunpack.c.h.b16 %v616
          %v943 = vunpack.c.l.b16 %v617
          %v944 = vunpack.c.h.b16 %v617
          %v945 = vunpack.c.l.b16 %v618
          %v946 = vunpack.c.h.b16 %v618
          %v947 = vunpack.c.l.b16 %v619
          %v948 = vunpack.c.h.b16 %v619
          %v949 = vunpack.c.l.b16 %v620
          %v950 = vunpack.c.h.b16 %v620
          %v951 = vunpack.c.l.b16 %v621
          %v952 = vunpack.c.h.b16 %v621
          %v953 = vunpack.c.l.b16 %v622
          %v954 = vunpack.c.h.b16 %v622
          %v955 = vunpack.c.l.b16 %v623
          %v956 = vunpack.c.h.b16 %v623
          %v957 = vunpack.c.l.b16 %v624
          %v958 = vunpack.c.h.b16 %v624
          %v959 = vunpack.c.l.b16 %v625
          %v960 = vunpack.c.h.b16 %v625
          %v961 = vunpack.c.l.b16 %v626
          %v962 = vunpack.c.h.b16 %v626
          %v963 = vunpack.c.l.b16 %v627
          %v964 = vunpack.c.h.b16 %v627
          %v965 = vunpack.c.l.b16 %v628
          %v966 = vunpack.c.h.b16 %v628
          %v967 = vunpack.c.l.b16 %v629
          %v968 = vunpack.c.h.b16 %v629
          %v969 = vunpack.c.l.b16 %v630
          %v970 = vunpack.c.h.b16 %v630
          %v971 = vunpack.c.l.b16 %v631
          %v972 = vunpack.c.h.b16 %v631
          %v973 = vunpack.c.l.b16 %v632
          %v974 = vunpack.c.h.b16 %v632
          %v975 = vpack.c.b16 %v913, %v911
          %v976 = vpack.c.b16 %v914, %v912
          %v977 = vpack.c.b16 %v917, %v915
          %v978 = vpack.c.b16 %v918, %v916
          %v979 = vpack.c.b16 %v921, %v919
          %v980 = vpack.c.b16 %v922, %v920
          %v981 = vpack.c.b16 %v925, %v923
          %v982 = vpack.c.b16 %v926, %v924
          %v983 = vpack.c.b16 %v929, %v927
          %v984 = vpack.c.b16 %v930, %v928
          %v985 = vpack.c.b16 %v933, %v931
          %v986 = vpack.c.b16 %v934, %v932
          %v987 = vpack.c.b16 %v937, %v935
          %v988 = vpack.c.b16 %v938, %v936
          %v989 = vpack.c.b16 %v941, %v939
          %v990 = vpack.c.b16 %v942, %v940
          %v991 = vpack.c.b16 %v945, %v943
          %v992 = vpack.c.b16 %v946, %v944
          %v993 = vpack.c.b16 %v949, %v947
          %v994 = vpack.c.b16 %v950, %v948
          %v995 = vpack.c.b16 %v953, %v951
          %v996 = vpack.c.b16 %v954, %v952
          %v997 = vpack.c.b16 %v957, %v955
          %v998 = vpack.c.b16 %v958, %v956
          %v999 = vpack.c.b16 %v961, %v959
          %v1000 = vpack.c.b16 %v962, %v960
          %v1001 = vpack.c.b16 %v965, %v963
          %v1002 = vpack.c.b16 %v966, %v964
          %v1003 = vpack.c.b16 %v969, %v967
          %v1004 = vpack.c.b16 %v970, %v968
          %v1005 = vpack.c.b16 %v973, %v971
          %v1006 = vpack.c.b16 %v974, %v972
          %1039 = vmatprep.subr.bf16.mxu0 %v976
          %1040 = vmatpush1.bf16.msra.mxu0 %v975
          %1041 = vmatprep.subr.bf16.mxu0 %v978
          %1042 = vmatpush1.bf16.msra.mxu0 %v977
          %1043 = vmatprep.subr.bf16.mxu0 %v980
          %1044 = vmatpush1.bf16.msra.mxu0 %v979
          %1045 = vmatprep.subr.bf16.mxu0 %v982
          %1046 = vmatpush1.bf16.msra.mxu0 %v981
          %1047 = vmatprep.subr.bf16.mxu0 %v984
          %1048 = vmatpush1.bf16.msra.mxu0 %v983
          %1049 = vmatprep.subr.bf16.mxu0 %v986
          %1050 = vmatpush1.bf16.msra.mxu0 %v985
          %1051 = vmatprep.subr.bf16.mxu0 %v988
          %1052 = vmatpush1.bf16.msra.mxu0 %v987
          %1053 = vmatprep.subr.bf16.mxu0 %v990
          %1054 = vmatpush1.bf16.msra.mxu0 %v989
          %1055 = vmatprep.subr.bf16.mxu0 %v992
          %1056 = vmatpush1.bf16.msra.mxu0 %v991
          %1057 = vmatprep.subr.bf16.mxu0 %v994
          %1058 = vmatpush1.bf16.msra.mxu0 %v993
          %1059 = vmatprep.subr.bf16.mxu0 %v996
          %1060 = vmatpush1.bf16.msra.mxu0 %v995
          %1061 = vmatprep.subr.bf16.mxu0 %v998
          %1062 = vmatpush1.bf16.msra.mxu0 %v997
          %1063 = vmatprep.subr.bf16.mxu0 %v1000
          %1064 = vmatpush1.bf16.msra.mxu0 %v999
          %1065 = vmatprep.subr.bf16.mxu0 %v1002
          %1066 = vmatpush1.bf16.msra.mxu0 %v1001
          %1067 = vmatprep.subr.bf16.mxu0 %v1004
          %1068 = vmatpush1.bf16.msra.mxu0 %v1003
          %1069 = vmatprep.subr.bf16.mxu0 %v1006
          %1070 = vmatpush1.bf16.msra.mxu0 %v1005
          %1071 = vmatprep.mubr.bf16.mxu0 %v637
          %1072 = vmatmul.mubr.bf16.gmra.mrb[0].mxu0 %v636
          %v1073 = vpop.f32.mrb[0].mxu0
          %v1074 = vadd.f32 %v871, %v1073
          %v1075 = vpop.f32.mrb[0].mxu0
          %v1076 = vadd.f32 %v873, %v1075
          %v1077 = vpop.f32.mrb[0].mxu0
          %v1078 = vadd.f32 %v875, %v1077
          %v1079 = vpop.f32.mrb[0].mxu0
          %v1080 = vadd.f32 %v877, %v1079
          %1081 = vdwg.mxu0
          %v1082 = vpack.c.bf16 %v1078, %v1074
          %v1083 = vpack.c.bf16 %v1080, %v1076
          %s1084 = sadd.s32 %s362, %s31
          %s1085 = smul.u32 %s1084, 2
          %s1086 = smul.addr %s1085, 8
          %s1087 = scalar_lea.vmem [#allocation2], %s1086
          %1088 = vst [vmem:[%s1087] sm:$0xff] %v1082
          %1089 = vst [vmem:[%s1087 + $0x8] sm:$0xff] %v1083
          %s1090 = smul.u32 %s31, 4
          %s1091 = smul.addr %s1090, 8
          %s1092 = scalar_lea.vmem [#allocation3], %s1091
          %v1093 = vld [vmem:[%s1092] sm:$0xff]
          %v1094 = vld [vmem:[%s1092 + $0x8] sm:$0xff]
          %v1095 = vld [vmem:[%s1092 + $0x10] sm:$0xff]
          %v1096 = vld [vmem:[%s1092 + $0x18] sm:$0xff]
          %v1097 = vstv %s355
          %v1098 = vmul.f32 %v1097, %v1074
          %v1099 = vmul.f32 %v1097, %v1076
          %v1100 = vmul.f32 %v1097, %v1078
          %v1101 = vmul.f32 %v1097, %v1080
          %v1102 = vadd.f32 %v1093, %v1098
          %v1103 = vadd.f32 %v1094, %v1099
          %v1104 = vadd.f32 %v1095, %v1100
          %v1105 = vadd.f32 %v1096, %v1101
          %1106 = vst [vmem:[%s1092] sm:$0xff] %v1102
          %1107 = vst [vmem:[%s1092 + $0x8] sm:$0xff] %v1103
          %1108 = vst [vmem:[%s1092 + $0x10] sm:$0xff] %v1104
          %1109 = vst [vmem:[%s1092 + $0x18] sm:$0xff] %v1105
          %p1110 = scmp.eq.s32.totalorder %s30, 4
          // Predicated region
          $region69: #{tpu_custom_call.1} parent=67 // pred_check
            %p1111 = pneg %p1110
          $region70: #{tpu_custom_call.1} parent=67 // pred_check_branch
            %1113 = sbr.rel (%p1111) target = $region72
          $region71: #{tpu_custom_call.1} parent=67 // pred_region
            %v1114 = vlaneseq
            %v1115 = vshrl.u32 %v1114, 7
            %v1116 = vadd.s32 %v1115, 8
            %vm1117 = vcmp.lt.s32.totalorder %v1115, 8
            %vm1118 = vcmp.lt.s32.totalorder %v1116, 8
            %v1119 = vsel %vm1117, %v1102, -1e+30
            %v1120 = vsel %vm1117, %v1103, -1e+30
            %v1121 = vsel %vm1118, %v1104, -1e+30
            %v1122 = vsel %vm1118, %v1105, -1e+30
            %v1123 = vmax.f32 %v1119, %v1121
            %v1124 = vrot.slane %v1123, 4
            %v1125 = vmax.f32 %v1123, %v1124
            %v1126 = vrot.slane %v1125, 2
            %v1127 = vmax.f32 %v1125, %v1126
            %v1128 = vrot.slane %v1127, 1
            %v1129 = vmax.f32 %v1127, %v1128
            %v1130 = vmax.f32 %v1120, %v1122
            %v1131 = vrot.slane %v1130, 4
            %v1132 = vmax.f32 %v1130, %v1131
            %v1133 = vrot.slane %v1132, 2
            %v1134 = vmax.f32 %v1132, %v1133
            %v1135 = vrot.slane %v1134, 1
            %v1136 = vmax.f32 %v1134, %v1135
            %v1137 = vsub.f32 %v1119, %v1129
            %v1138 = vsub.f32 %v1120, %v1136
            %v1139 = vsub.f32 %v1121, %v1129
            %v1140 = vsub.f32 %v1122, %v1136
            %v1141 = vmul.f32 %v1137, 1.442695
            %v1142 = vpow.pop %v1141
            %v1143 = vmul.f32 %v1138, 1.442695
            %v1144 = vpow.pop %v1143
            %v1145 = vmul.f32 %v1139, 1.442695
            %v1146 = vpow.pop %v1145
            %v1147 = vmul.f32 %v1140, 1.442695
            %v1148 = vpow.pop %v1147
            %v1149 = vadd.f32 %v1142, %v1146
            %v1150 = vrot.slane %v1149, 4
            %v1151 = vadd.f32 %v1149, %v1150
            %v1152 = vrot.slane %v1151, 2
            %v1153 = vadd.f32 %v1151, %v1152
            %v1154 = vrot.slane %v1153, 1
            %v1155 = vadd.f32 %v1153, %v1154
            %v1156 = vadd.f32 %v1144, %v1148
            %v1157 = vrot.slane %v1156, 4
            %v1158 = vadd.f32 %v1156, %v1157
            %v1159 = vrot.slane %v1158, 2
            %v1160 = vadd.f32 %v1158, %v1159
            %v1161 = vrot.slane %v1160, 1
            %v1162 = vadd.f32 %v1160, %v1161
            %v1163 = vlog2.pop %v1155
            %v1164 = vmul.f32 %v1163, 0.6931472
            %v1165 = vlog2.pop %v1162
            %v1166 = vmul.f32 %v1165, 0.6931472
            %v1167 = vsub.f32 %v1137, %v1164
            %v1168 = vsub.f32 %v1138, %v1166
            %v1169 = vsub.f32 %v1139, %v1164
            %v1170 = vsub.f32 %v1140, %v1166
            %1171 = vst [vmem:[%s347] sm:$0xff] %v1167
            %1172 = vst [vmem:[%s347 + $0x8] sm:$0xff] %v1168
            %1173 = vst [vmem:[%s347 + $0x10] sm:$0xff] %v1169
            %1174 = vst [vmem:[%s347 + $0x18] sm:$0xff] %v1170
          $region72: #{tpu_custom_call.1} parent=67 // pred_fallthru
            _
        $region68: #{tpu_custom_call.1} parent=47 // pred_fallthru
          _
        %s1175 = sand.u32 %s206, 1
        %s1176 = scalar_lea.sflag [#allocation6], %s1175
        %s1177 = sand.u32 %s206, 1
        %s1178 = smul.addr %s1177, 32
        %s1179 = scalar_lea.vmem [#allocation11], %s1178
        // Predicated region
        $region73: #{tpu_custom_call.1} parent=47 // pred_check
          %p1180 = pneg %p216
        $region74: #{tpu_custom_call.1} parent=47 // pred_check_branch
          %1182 = sbr.rel (%p1180) target = $region76
        $region75: #{tpu_custom_call.1} parent=47 // pred_region
          %p1183 = scmp.eq.s32.totalorder %s30, 4
          %s1184 = scalar_select %p1183, %s31, 0
          %s1185 = smul.u32 2, %s1184
          %s1187 = ssub.s32 512, 512
          %1188 = vsyncadd %s1176, %s1187
          %s1189 = smul.addr %s1185, 128
          %s1190 = scalar_lea.hbm %s7, %s1189
          %s1191 = sshll.u32 %s1179, 4
          %s1192 = int_to_ptr.vmem [resolvable:$true] %s1191
          %1197 = dma.vmem_to_hbm [thread:$0]  %s1192, 512, %s1190, %s1176, 256, 512, 16
        $region76: #{tpu_custom_call.1} parent=47 // pred_fallthru
          _
      $region48: #{tpu_custom_call.1} parent=5 // pred_fallthru
        _
      %p1198 = scmp.le.s32.totalorder 2, %s21
      // Predicated region
      $region77: #{tpu_custom_call.1} parent=5 // pred_check
        %p1199 = pneg %p1198
      $region78: #{tpu_custom_call.1} parent=5 // pred_check_branch
        %1201 = sbr.rel (%p1199) target = $region80
      $region79: #{tpu_custom_call.1} parent=5 // pred_region
        %s1202 = ssub.s32 %s21, 2
        // Predicated region
        $region81: #{tpu_custom_call.1} parent=79 // pred_check
          %p1203 = pneg %p222
        $region82: #{tpu_custom_call.1} parent=79 // pred_check_branch
          %1205 = sbr.rel (%p1203) target = $region84
        $region83: #{tpu_custom_call.1} parent=79 // pred_region
          %s1206 = sand.u32 %s207, 1
          %s1207 = scalar_lea.sflag [#allocation6], %s1206
          %s1208 = sand.u32 %s207, 1
          %s1209 = smul.addr %s1208, 32
          %s1210 = scalar_lea.vmem [#allocation11], %s1209
          %1211 = dma.done %s1207, 512
        $region84: #{tpu_custom_call.1} parent=79 // pred_fallthru
          _
      $region80: #{tpu_custom_call.1} parent=5 // pred_fallthru
        _
    $region6: #{tpu_custom_call.1} parent=1 // loop_footer
      %s25 = sadd.s32 1, %s21
    $region7: #{tpu_custom_call.1} parent=1 // loop_footer_branch
      %20 = sbr.rel target = $region3
    $region8: #{tpu_custom_call.1} parent=1 // loop_exit
      _
    %1212 = vsyncpa [#allocation5], 1
    %s1213 = scalar_lea.sflag [#allocation5], 1
    %1214 = vsyncpa %s1213, 1
    %1215 = vsyncpa [#allocation10], 1
    %1216 = vsyncpa [#allocation6], 1
    %s1217 = scalar_lea.sflag [#allocation6], 1
    %1218 = vsyncpa %s1217, 1
    %1219 = vsyncpa [#allocation7], 1
    %s1220 = scalar_lea.sflag [#allocation7], 1
    %1221 = vsyncpa %s1220, 1

</llo_original>
